<compile_context>
chip_gen: v7x
topology: tpu7x:2x2x1
jax: 0.10.0
libtpu: 0.0.40
codegen_flags: <defaults>
</compile_context>

<pallas_src>
import numpy as np

import jax
import jax.numpy as jnp
from jax.experimental import pallas as pl
from jax.experimental.pallas import tpu as pltpu


# ---------------------------------------------------------------------------
# Kernel 1: temporal edge-padding + (B, T, C, H, W) -> (B, C, T+2, H, W) permute
# ---------------------------------------------------------------------------
def _pad_permute_kernel(src_ref, x_ref, o_ref):
    # src_ref (SMEM scalar-prefetch table) is only used inside the index_maps.
    del src_ref
    o_ref[...] = x_ref[...]          # (C, H, W) tile, moved by strided DMA


def pad_permute(x):
    """x: (B, T, C, H, W) -> (B, C, T+2, H, W) with frame order [0, 0..T-1, 6].

    Mirrors torch.cat((x[:, 0:1], x, x[:, 6:7]), 1).permute(0, 2, 1, 3, 4).
    """
    B, T, C, H, W = x.shape
    # The module hardcodes frame index 6 for the trailing pad (expects 7 frames).
    src_host = np.array([0] + list(range(T)) + [6], dtype=np.int32)
    Tp = int(src_host.shape[0])
    src = jnp.asarray(src_host)

    grid_spec = pltpu.PrefetchScalarGridSpec(
        num_scalar_prefetch=1,                      # src table -> SMEM
        grid=(B, Tp),
        in_specs=[
            # gather source frame src[t] of batch b; b and t dims squeezed away
            pl.BlockSpec((None, None, C, H, W),
                         lambda b, t, src: (b, src[t], 0, 0, 0)),
        ],
        # scatter into the permuted layout: frame axis now sits after channels
        out_specs=pl.BlockSpec((None, C, None, H, W),
                               lambda b, t, src: (b, 0, t, 0, 0)),
    )

    return pl.pallas_call(
        _pad_permute_kernel,
        out_shape=jax.ShapeDtypeStruct((B, C, Tp, H, W), x.dtype),
        grid_spec=grid_spec,
        compiler_params=pltpu.CompilerParams(
            dimension_semantics=("parallel", "arbitrary")),
    )(src, x)


# ---------------------------------------------------------------------------
# Kernel 2: context prototypes  —  reshape(way, -1, 1024).mean(dim=1)
# ---------------------------------------------------------------------------
def _prototype_mean_kernel(x_ref, o_ref):
    _, g, _ = x_ref.shape
    o_ref[...] = jnp.sum(x_ref[...], axis=1) * (1.0 / g)


def prototype_mean(ctx_padded, way, feat=1024):
    """ctx_padded: padded/permuted context video (B, C, T+2, H, W) -> (way, feat)."""
    total = int(np.prod(ctx_padded.shape))
    if total % (way * feat) != 0:
        raise ValueError(
            f"cannot reshape {ctx_padded.shape} into (way={way}, -1, {feat})")
    g = total // (way * feat)
    xg = ctx_padded.reshape(way, g, feat)           # row-major, same as torch.reshape

    return pl.pallas_call(
        _prototype_mean_kernel,
        out_shape=jax.ShapeDtypeStruct((way, feat), ctx_padded.dtype),
        grid_spec=pltpu.PrefetchScalarGridSpec(
            num_scalar_prefetch=0,
            grid=(1,),
            in_specs=[pl.BlockSpec((way, g, feat), lambda i: (0, 0, 0))],
            out_specs=pl.BlockSpec((way, feat), lambda i: (0, 0)),
        ),
        compiler_params=pltpu.CompilerParams(
            dimension_semantics=("arbitrary",)),
    )(xg)


# ---------------------------------------------------------------------------
# Flow_i3d_backbone.forward (kernelizable data path)
# ---------------------------------------------------------------------------
def flow_i3d_backbone_forward(context_feature, context_labels, target_feature, *, way):
    # The (features, labels) sort in the reference forward does not influence the
    # returned values (context_features is overwritten by the reshape of the raw
    # padded video), so context_labels are unused here.
    del context_labels

    ctx_padded = pad_permute(context_feature)       # (B, C, T+2, H, W)
    tgt_padded = pad_permute(target_feature)        # (B, C, T+2, H, W)

    context_features = prototype_mean(ctx_padded, way)   # (way, 1024)

    # TODO(synk): self.i3d.extract_features(...) (pretrained InceptionI3d,
    # 'model/flow_charades.pt' checkpoint) is not kernelized; return the
    # padded/permuted I3D input tensor as the target-path output.
    return {"context_features": context_features, "target_features": tgt_padded}


# ---------------------------------------------------------------------------
# Self-test
# ---------------------------------------------------------------------------
if __name__ == "__main__":
    way, shot = 2, 2
    B_ctx, B_tgt = way * shot, 2
    T, C, H, W = 7, 2, 16, 16                       # 7 flow frames, 2 flow channels

    key = jax.random.PRNGKey(0)
    k1, k2 = jax.random.split(key)
    context_feature = jax.random.normal(k1, (B_ctx, T, C, H, W), jnp.float32)
    target_feature = jax.random.normal(k2, (B_tgt, T, C, H, W), jnp.float32)
    context_labels = jnp.array([0, 0, 1, 1], jnp.int32)

    out = flow_i3d_backbone_forward(
        context_feature, context_labels, target_feature, way=way)
    out = jax.block_until_ready(out)

    # Pure-jnp reference of the same (visible) forward semantics.
    def ref_pad(x):
        return jnp.transpose(
            jnp.concatenate([x[:, 0:1], x, x[:, 6:7]], axis=1), (0, 2, 1, 3, 4))

    ref_ctx = ref_pad(context_feature).reshape(way, -1, 1024).mean(axis=1)
    ref_tgt = ref_pad(target_feature)

    np.testing.assert_allclose(np.asarray(out["context_features"]),
                               np.asarray(ref_ctx), rtol=1e-5, atol=1e-5)
    np.testing.assert_allclose(np.asarray(out["target_features"]),
                               np.asarray(ref_tgt), rtol=0, atol=0)

    print("KERNEL_OK")
</pallas_src>

<mosaic_0001>
module attributes {stable_mosaic.version = 11 : i64} {
  func.func @_pad_permute_kernel(%arg0: i32, %arg1: i32, %arg2: memref<9xi32, #tpu.memory_space<smem>>, %arg3: memref<1x1x2x16x16xf32, #tpu.memory_space<vmem>>, %arg4: memref<1x2x1x16x16xf32, #tpu.memory_space<vmem>>) attributes {dimension_semantics = [#tpu.dimension_semantics<parallel>, #tpu.dimension_semantics<arbitrary>], iteration_bounds = array<i64: 4, 9>, scalar_prefetch = 1 : i64, scratch_operands = 0 : i64, tpu.core_type = #tpu.core_type<tc>, window_params = [{transform_indices = @transform_0, window_bounds = array<i64: 1, 1, 2, 16, 16>}, {transform_indices = @transform_1, window_bounds = array<i64: 1, 2, 1, 16, 16>}]} {
    %c0 = arith.constant 0 : index
    %c0_0 = arith.constant 0 : index
    %c0_1 = arith.constant 0 : index
    %c0_2 = arith.constant 0 : index
    %c0_3 = arith.constant 0 : index
    %0 = vector.load %arg3[%c0, %c0_0, %c0_1, %c0_2, %c0_3] : memref<1x1x2x16x16xf32, #tpu.memory_space<vmem>>, vector<1x1x2x16x16xf32>
    %1 = vector.shape_cast %0 : vector<1x1x2x16x16xf32> to vector<2x16x16xf32>
    %c0_4 = arith.constant 0 : index
    %c0_5 = arith.constant 0 : index
    %c0_6 = arith.constant 0 : index
    %c0_7 = arith.constant 0 : index
    %c0_8 = arith.constant 0 : index
    %2 = vector.load %arg4[%c0_4, %c0_5, %c0_6, %c0_7, %c0_8] : memref<1x2x1x16x16xf32, #tpu.memory_space<vmem>>, vector<1x2x1x16x16xf32>
    %3 = vector.shape_cast %2 : vector<1x2x1x16x16xf32> to vector<2x16x16xf32>
    %4 = vector.shape_cast %1 : vector<2x16x16xf32> to vector<1x2x1x16x16xf32>
    tpu.vector_store %arg4[%c0_4, %c0_5, %c0_6, %c0_7, %c0_8], %4 {strides = array<i32>} : memref<1x2x1x16x16xf32, #tpu.memory_space<vmem>>, vector<1x2x1x16x16xf32>,
    return
  }
  func.func @transform_0(%arg0: i32, %arg1: i32, %arg2: memref<9xi32, #tpu.memory_space<smem>>) -> (i32, i32, i32, i32, i32) {
    %0 = arith.index_cast %arg1 : i32 to index
    %1 = memref.load %arg2[%0] : memref<9xi32, #tpu.memory_space<smem>>
    %c0_i32 = arith.constant 0 : i32
    %c0_i32_0 = arith.constant 0 : i32
    %c0_i32_1 = arith.constant 0 : i32
    %c0_i32_2 = arith.constant 0 : i32
    return %arg0, %1, %c0_i32, %c0_i32_0, %c0_i32_1 : i32, i32, i32, i32, i32
  }
  func.func @transform_1(%arg0: i32, %arg1: i32, %arg2: memref<9xi32, #tpu.memory_space<smem>>) -> (i32, i32, i32, i32, i32) {
    %c0_i32 = arith.constant 0 : i32
    %c0_i32_0 = arith.constant 0 : i32
    %c0_i32_1 = arith.constant 0 : i32
    %c0_i32_2 = arith.constant 0 : i32
    return %arg0, %c0_i32, %arg1, %c0_i32_0, %c0_i32_1 : i32, i32, i32, i32, i32
  }
}

</mosaic_0001>

<llo_original>
// kernel: tpu_custom_call.1
$region0: #{tpu_custom_call.1}
  #allocation0 [shape = 'u32[]', space=smem, size = 0x4, offset = 0x4, fixed_abs, tag = 'smem constant byte address 0x4 - core index']
  #allocation1 [shape = 'u32[144,128]{1,0:T(1,128)}', space=vmem, size = 0x12000, scoped, tag = 'internal scratch']
  #allocation2 [shape = 's32[1]{0}', space=sflag, size = 0x4, scoped, tag = 'scoped memory for tpu_custom_call.1']
  #allocation3 [shape = 'u8[512]{0}', space=smem, size = 0x200, scoped, tag = 'prefetched SMEM operand 0']
  #allocation8 [shape = 's32[]', space=sflag, size = 0x4, offset = 0, fixed_abs, tag = 'sflag constant byte address 0x0 - dummy sync flag']
  %s0 = inlined_call_operand.hbm [shape: s32[9], index: 0, kind: input, shape index: {}]
  %s1 = inlined_call_operand.hbm [shape: f32[4,7,2,16,16], index: 1, kind: input, shape index: {}]
  %s2 = inlined_call_operand.hbm [shape: f32[4,2,9,16,16], index: 2, kind: output, shape index: {}]
  %s3 = sld [smem:[#allocation0]]
  $region41: #{tpu_custom_call.1} parent=0
    _
  %s5 = ssub.s32 1, %s3
  %s6 = scalar_select 0, %s5, %s3
  %8 = dma.hbm_to_smem %s0, 16, [#allocation3], [#allocation2]
  %9 = dma.done [#allocation2], 16
  %10 = sfence
  $region1: #{tpu_custom_call.1} parent=0
    #allocation4 [shape = 'u8[32768]{0}', space=vmem, size = 0x8000, scoped, tag = 'input window, operand 1']
    #allocation5 [shape = 's32[2]{0}', space=sflag, size = 0x8, scoped, tag = 'scoped memory for tpu_custom_call.1']
    #allocation6 [shape = 's32[2]{0}', space=sflag, size = 0x8, scoped, tag = 'scoped memory for tpu_custom_call.1']
    #allocation7 [shape = 'u8[32768]{0}', space=vmem, size = 0x8000, scoped, tag = 'output window, operand 0']
    %11 = vsyncpa [#allocation5], 0
    %s12 = scalar_lea.sflag [#allocation5], 1
    %13 = vsyncpa %s12, 0
    %14 = vsyncpa [#allocation6], 0
    %s15 = scalar_lea.sflag [#allocation6], 1
    %16 = vsyncpa %s15, 0
    loop: start=0, step=1, limit=38
    $region2: #{tpu_custom_call.1} parent=1 // loop_pre_header
      _
    $region3: #{tpu_custom_call.1} parent=1 // loop_header
      %s18 = sphi 0, %s22
      %p19 = scmp.ge.s32.totalorder %s18, 38
      %s25 = sphi 0, %s37
      %s26 = sphi 0, %s33
      %s27 = sphi 0, %s25
      %s28 = sphi 0, %s26
      %s29 = sphi 0, %s27
      %s30 = sphi 0, %s28
      %s44 = sphi 0, %s46
      %s47 = sphi 0, %s44
      %s48 = sphi 0, %s47
      %s64 = sphi 0, %s48
      %s72 = sphi 0, %s74
      %s75 = sphi 0, %s72
      %s76 = sphi 0, %s75
      %s92 = sphi 0, %s76
    $region4: #{tpu_custom_call.1} parent=1 // loop_header_branch
      %21 = sbr.rel (%p19) target = $region8
    $region5: #{tpu_custom_call.1} parent=1 // loop_body
      %s23 = ssub.s32 %s18, 1
      %s24 = ssub.s32 %s18, 2
      %s31 = sadd.s32 1, %s26
      %p32 = scmp.ge.s32.totalorder %s31, 9
      %s33 = scalar_select %p32, 0, %s31
      %s34 = sadd.s32 1, %s25
      %s35 = scalar_select %p32, %s34, %s25
      %p36 = scmp.ge.s32.totalorder %s35, 4
      %s37 = scalar_select %p36, 0, %s35
      %s38 = sld [smem:[#allocation3 + %s26]]
      %s39 = sld [smem:[#allocation3 + %s33]]
      %s40 = ssub.s32 %s25, %s37
      %s41 = ssub.s32 %s38, %s39
      %s42 = sor.u32 %s40, %s41
      %p43 = scmp.eq.s32.totalorder %s42, 0
      %s45 = sadd.s32 %s44, 1
      %s46 = scalar_select %p43, %s44, %s45
      %p49 = pneg %p43
      %p50 = scmp.eq.s32.totalorder %s18, 35
      %p51 = por %p49, %p50
      %p52 = scmp.ne.s32.totalorder %s44, %s47
      %p53 = scmp.eq.s32.totalorder %s18, 0
      %p54 = por %p52, %p53
      %p55 = scmp.ne.s32.totalorder %s44, %s47
      %p56 = scmp.eq.s32.totalorder %s23, 35
      %p57 = por %p55, %p56
      %p58 = scmp.ne.s32.totalorder %s47, %s48
      %p59 = scmp.eq.s32.totalorder %s23, 0
      %p60 = por %p58, %p59
      %p61 = scmp.ne.s32.totalorder %s47, %s48
      %p62 = scmp.eq.s32.totalorder %s24, 35
      %p63 = por %p61, %p62
      %p65 = scmp.ne.s32.totalorder %s48, %s64
      %p66 = scmp.eq.s32.totalorder %s24, 0
      %p67 = por %p65, %p66
      %s68 = ssub.s32 %s25, %s37
      %s69 = ssub.s32 %s26, %s33
      %s70 = sor.u32 %s68, %s69
      %p71 = scmp.eq.s32.totalorder %s70, 0
      %s73 = sadd.s32 %s72, 1
      %s74 = scalar_select %p71, %s72, %s73
      %p77 = pneg %p71
      %p78 = scmp.eq.s32.totalorder %s18, 35
      %p79 = por %p77, %p78
      %p80 = scmp.ne.s32.totalorder %s72, %s75
      %p81 = scmp.eq.s32.totalorder %s18, 0
      %p82 = por %p80, %p81
      %p83 = scmp.ne.s32.totalorder %s72, %s75
      %p84 = scmp.eq.s32.totalorder %s23, 35
      %p85 = por %p83, %p84
      %p86 = scmp.ne.s32.totalorder %s75, %s76
      %p87 = scmp.eq.s32.totalorder %s23, 0
      %p88 = por %p86, %p87
      %p89 = scmp.ne.s32.totalorder %s75, %s76
      %p90 = scmp.eq.s32.totalorder %s24, 35
      %p91 = por %p89, %p90
      %p93 = scmp.ne.s32.totalorder %s76, %s92
      %p94 = scmp.eq.s32.totalorder %s24, 0
      %p95 = por %p93, %p94
      %p96 = scmp.le.s32.totalorder 1, %s18
      %p97 = scmp.lt.s32.totalorder %s18, 37
      %p98 = pnand %p96, %p97
      %p99 = pneg %p98
      // Predicated region
      $region9: #{tpu_custom_call.1} parent=5 // pred_check
        _
      $region10: #{tpu_custom_call.1} parent=5 // pred_check_branch
        %101 = sbr.rel (%p98) target = $region12
      $region11: #{tpu_custom_call.1} parent=5 // pred_region
        %s102 = ssub.s32 %s18, 1
      $region12: #{tpu_custom_call.1} parent=5 // pred_fallthru
        _
      %p103 = scmp.lt.s32.totalorder %s18, 36
      // Predicated region
      $region13: #{tpu_custom_call.1} parent=5 // pred_check
        %p104 = pneg %p103
      $region14: #{tpu_custom_call.1} parent=5 // pred_check_branch
        %106 = sbr.rel (%p104) target = $region16
      $region15: #{tpu_custom_call.1} parent=5 // pred_region
        // Predicated region
        $region17: #{tpu_custom_call.1} parent=15 // pred_check
          %p107 = pneg %p54
        $region18: #{tpu_custom_call.1} parent=15 // pred_check_branch
          %109 = sbr.rel (%p107) target = $region20
        $region19: #{tpu_custom_call.1} parent=15 // pred_region
          %s110 = sand.u32 %s44, 1
          %s111 = scalar_lea.sflag [#allocation5], %s110
          %s112 = sand.u32 %s44, 1
          %s113 = smul.addr %s112, 32
          %s114 = scalar_lea.vmem [#allocation4], %s113
          %s115 = sld [smem:[#allocation3 + %s26]]
          %s117 = ssub.s32 512, 512
          %118 = vsyncadd %s111, %s117
          %s119 = smul.addr %s115, 4
          %s120 = smul.addr %s25, 28
          %s121 = sadd.s32 %s119, %s120
          %s122 = smul.addr %s121, 128
          %s123 = scalar_lea.hbm %s1, %s122
          %s124 = sshll.u32 %s114, 4
          %s125 = int_to_ptr.vmem [resolvable:$true] %s124
          %130 = dma.hbm_to_vmem [thread:$0]  %s123, 512, %s125, %s111, 128, 128, 8
        $region20: #{tpu_custom_call.1} parent=15 // pred_fallthru
          _
      $region16: #{tpu_custom_call.1} parent=5 // pred_fallthru
        _
      %p131 = scmp.le.s32.totalorder 1, %s18
      %p132 = scmp.lt.s32.totalorder %s18, 37
      %p133 = pnand %p131, %p132
      %p134 = pneg %p133
      // Predicated region
      $region21: #{tpu_custom_call.1} parent=5 // pred_check
        _
      $region22: #{tpu_custom_call.1} parent=5 // pred_check_branch
        %136 = sbr.rel (%p133) target = $region24
      $region23: #{tpu_custom_call.1} parent=5 // pred_region
        %s137 = ssub.s32 %s18, 1
        %s138 = sand.u32 %s47, 1
        %s139 = scalar_lea.sflag [#allocation5], %s138
        %s140 = sand.u32 %s47, 1
        %s141 = smul.addr %s140, 32
        %s142 = scalar_lea.vmem [#allocation4], %s141
        // Predicated region
        $region25: #{tpu_custom_call.1} parent=23 // pred_check
          %p143 = pneg %p60
        $region26: #{tpu_custom_call.1} parent=23 // pred_check_branch
          %145 = sbr.rel (%p143) target = $region28
        $region27: #{tpu_custom_call.1} parent=23 // pred_region
          %146 = dma.done %s139, 512
        $region28: #{tpu_custom_call.1} parent=23 // pred_fallthru
          _
        %s147 = sand.u32 %s47, 1
        %s148 = scalar_lea.sflag [#allocation5], %s147
        %s149 = sand.u32 %s47, 1
        %s150 = smul.addr %s149, 32
        %s151 = scalar_lea.vmem [#allocation4], %s150
        %p152 = pneg %p60
        %p153 = pneg %p57
        %p154 = pneg %p88
        %p155 = pneg %p85
        %s156 = sand.u32 %s75, 1
        %s157 = scalar_lea.sflag [#allocation6], %s156
        %s158 = sand.u32 %s75, 1
        %s159 = smul.addr %s158, 32
        %s160 = scalar_lea.vmem [#allocation7], %s159
        %s161 = sld [smem:[#allocation3 + %s28]]
        %v162 = vld [vmem:[%s142] sm:$0xff]
        %v163 = vld [vmem:[%s142 + $0x8] sm:$0xff]
        %v164 = vld [vmem:[%s142 + $0x10] sm:$0xff]
        %v165 = vld [vmem:[%s142 + $0x18] sm:$0xff]
        %vm166 = vcmask 130048
        %167 = vst.msk [vmem:[%s160] sm:$0xff] %vm166, %v162
        %168 = vst.msk [vmem:[%s160 + $0x8] sm:$0xff] %vm166, %v163
        %169 = vst.msk [vmem:[%s160 + $0x10] sm:$0xff] %vm166, %v164
        %170 = vst.msk [vmem:[%s160 + $0x18] sm:$0xff] %vm166, %v165
        %s171 = sand.u32 %s75, 1
        %s172 = scalar_lea.sflag [#allocation6], %s171
        %s173 = sand.u32 %s75, 1
        %s174 = smul.addr %s173, 32
        %s175 = scalar_lea.vmem [#allocation7], %s174
        // Predicated region
        $region29: #{tpu_custom_call.1} parent=23 // pred_check
          %p176 = pneg %p85
        $region30: #{tpu_custom_call.1} parent=23 // pred_check_branch
          %178 = sbr.rel (%p176) target = $region32
        $region31: #{tpu_custom_call.1} parent=23 // pred_region
          #allocation9 [shape = 'u32[6]{0}', space=smem, size = 0x18, scoped, tag = 'DMA stride descriptor']
          %s180 = ssub.s32 512, 512
          %181 = vsyncadd %s172, %s180
          %s182 = smul.addr %s28, 2
          %s183 = smul.addr %s27, 36
          %s184 = sadd.s32 %s182, %s183
          %s185 = smul.addr %s184, 128
          %s186 = scalar_lea.hbm %s2, %s185
          %s188 = sshll.u32 1, 14
          %s189 = sxor.u32 4294967295, %s188
          %s192 = sshll.u32 7, 18
          %s193 = sxor.u32 4294967295, %s192
          %s194 = sand.u32 0, %s193
          %s196 = sor.u32 %s194, 0
          %s198 = sshll.u32 3, 24
          %s199 = sxor.u32 4294967295, %s198
          %s200 = sand.u32 %s196, %s199
          %s202 = sor.u32 %s200, 0
          %s203 = sshll.u32 %s175, 4
          %s204 = int_to_ptr.vmem [resolvable:$true] %s203
          %210 = sst [smem:[#allocation9]] 256
          %s211 = scalar_lea.smem [#allocation9], 1
          %212 = sst [smem:[%s211]] 2304
          %s213 = scalar_lea.smem [#allocation9], 2
          %214 = sst [smem:[%s213]] 2
          %s215 = scalar_lea.smem [#allocation9], 3
          %216 = sst [smem:[%s215]] 128
          %s217 = scalar_lea.smem [#allocation9], 4
          %218 = sst [smem:[%s217]] 128
          %s219 = scalar_lea.smem [#allocation9], 5
          %220 = sst [smem:[%s219]] 8
          %222 = dma.general %s204, 512, %s186, %s172, [#allocation8], [#allocation9], %s202, 0
        $region32: #{tpu_custom_call.1} parent=23 // pred_fallthru
          _
      $region24: #{tpu_custom_call.1} parent=5 // pred_fallthru
        _
      %p223 = scmp.le.s32.totalorder 2, %s18
      // Predicated region
      $region33: #{tpu_custom_call.1} parent=5 // pred_check
        %p224 = pneg %p223
      $region34: #{tpu_custom_call.1} parent=5 // pred_check_branch
        %226 = sbr.rel (%p224) target = $region36
      $region35: #{tpu_custom_call.1} parent=5 // pred_region
        %s227 = ssub.s32 %s18, 2
        // Predicated region
        $region37: #{tpu_custom_call.1} parent=35 // pred_check
          %p228 = pneg %p91
        $region38: #{tpu_custom_call.1} parent=35 // pred_check_branch
          %230 = sbr.rel (%p228) target = $region40
        $region39: #{tpu_custom_call.1} parent=35 // pred_region
          %s231 = sand.u32 %s76, 1
          %s232 = scalar_lea.sflag [#allocation6], %s231
          %s233 = sand.u32 %s76, 1
          %s234 = smul.addr %s233, 32
          %s235 = scalar_lea.vmem [#allocation7], %s234
          %236 = dma.done %s232, 512
        $region40: #{tpu_custom_call.1} parent=35 // pred_fallthru
          _
      $region36: #{tpu_custom_call.1} parent=5 // pred_fallthru
        _
    $region6: #{tpu_custom_call.1} parent=1 // loop_footer
      %s22 = sadd.s32 1, %s18
    $region7: #{tpu_custom_call.1} parent=1 // loop_footer_branch
      %17 = sbr.rel target = $region3
    $region8: #{tpu_custom_call.1} parent=1 // loop_exit
      _
    %237 = vsyncpa [#allocation5], 1
    %s238 = scalar_lea.sflag [#allocation5], 1
    %239 = vsyncpa %s238, 1
    %240 = vsyncpa [#allocation6], 1
    %s241 = scalar_lea.sflag [#allocation6], 1
    %242 = vsyncpa %s241, 1

</llo_original>
